<compile_context>
chip_gen: v5e
topology: v5e:2x2
jax: 0.10.0
libtpu: 0.0.40
codegen_flags: <defaults>
</compile_context>

<pallas_src>
import jax
import jax.numpy as jnp
from jax.experimental import pallas as pl
from jax.experimental.pallas import tpu as pltpu


def _star_relu_kernel(scale_ref, bias_ref, x_ref, o_ref):
    s = scale_ref[0, 0]
    b = bias_ref[0, 0]
    x = x_ref[...]
    r = jnp.maximum(x, 0.0)          # ReLU without materializing a zero vreg
    o_ref[...] = (s * (r * r) + b).astype(o_ref.dtype)


def _round_up(a, b):
    return ((a + b - 1) // b) * b


def star_relu(x, scale, bias, *, lane_width=1024, row_tile=512):
    """x: any-shape array (e.g. NCHW). scale, bias: shape-(1,) params."""
    orig_shape = x.shape
    flat = x.reshape(-1)
    n = flat.shape[0]

    # --- Lane-dense layout: last dim = L, a large multiple of 128. ---
    L = lane_width
    while L > 128 and n < L:          # shrink only for tiny inputs
        L //= 2
    n_pad = _round_up(n, L)
    rows = n_pad // L
    rows = _round_up(rows, 8)         # keep sublane dim a multiple of 8
    total = rows * L
    if total != n:
        flat = jnp.pad(flat, (0, total - n))
    x2d = flat.reshape(rows, L)

    # --- Tile selection: large tiles, cdiv grid (no whole-array fallback). ---
    rt = min(row_tile, rows)          # rows is a multiple of 8, so rt is too
    if rows > 8 and rows <= rt:
        # Ensure >= 2 grid programs when possible (v7x megacore sharding).
        rt = max(8, _round_up(rows // 2, 8))
    grid = (pl.cdiv(rows, rt),)

    scale2d = jnp.asarray(scale, jnp.float32).reshape(1, 1)
    bias2d = jnp.asarray(bias, jnp.float32).reshape(1, 1)

    out2d = pl.pallas_call(
        _star_relu_kernel,
        out_shape=jax.ShapeDtypeStruct((rows, L), x.dtype),
        grid_spec=pltpu.PrefetchScalarGridSpec(
            num_scalar_prefetch=0,
            grid=grid,
            in_specs=[
                pl.BlockSpec(memory_space=pltpu.SMEM),   # scale (1,1)
                pl.BlockSpec(memory_space=pltpu.SMEM),   # bias  (1,1)
                pl.BlockSpec((rt, L), lambda i: (i, 0)),
            ],
            out_specs=pl.BlockSpec((rt, L), lambda i: (i, 0)),
        ),
        compiler_params=pltpu.CompilerParams(
            dimension_semantics=("parallel",),
        ),
    )(scale2d, bias2d, x2d)

    return out2d.reshape(-1)[:n].reshape(orig_shape)


if __name__ == "__main__":
    key = jax.random.PRNGKey(0)

    # Module __init__ defaults: scale_value=1.0, bias_value=0.0, shape (1,).
    # Use slightly non-trivial deterministic values to exercise the math.
    scale = jnp.array([1.5], dtype=jnp.float32)
    bias = jnp.array([-0.25], dtype=jnp.float32)

    # NCHW input, small shapes.
    x = jax.random.normal(key, (2, 4, 16, 16), dtype=jnp.float32)

    out = star_relu(x, scale, bias)
    out = jax.block_until_ready(out)

    # Reference check (plain JAX).
    ref = scale[0] * jnp.maximum(x, 0.0) ** 2 + bias[0]
    assert out.shape == x.shape
    assert out.dtype == x.dtype
    assert jnp.allclose(out, ref, atol=1e-6, rtol=1e-6), "mismatch vs reference"

    print("KERNEL_OK")
</pallas_src>

<mosaic_0001>
module attributes {stable_mosaic.version = 11 : i64} {
  func.func @_star_relu_kernel(%arg0: i32, %arg1: memref<1x1xf32, #tpu.memory_space<smem>>, %arg2: memref<1x1xf32, #tpu.memory_space<smem>>, %arg3: memref<8x1024xf32, #tpu.memory_space<vmem>>, %arg4: memref<8x1024xf32, #tpu.memory_space<vmem>>) attributes {dimension_semantics = [#tpu.dimension_semantics<parallel>], iteration_bounds = array<i64: 1>, scalar_prefetch = 0 : i64, scratch_operands = 0 : i64, tpu.core_type = #tpu.core_type<tc>, window_params = [{transform_indices = @transform_0, window_bounds = array<i64: 1, 1>}, {transform_indices = @transform_1, window_bounds = array<i64: 1, 1>}, {transform_indices = @transform_2, window_bounds = array<i64: 8, 1024>}, {transform_indices = @transform_3, window_bounds = array<i64: 8, 1024>}]} {
    %c0 = arith.constant 0 : index
    %c0_0 = arith.constant 0 : index
    %0 = memref.load %arg1[%c0, %c0_0] : memref<1x1xf32, #tpu.memory_space<smem>>
    %c0_1 = arith.constant 0 : index
    %c0_2 = arith.constant 0 : index
    %1 = memref.load %arg2[%c0_1, %c0_2] : memref<1x1xf32, #tpu.memory_space<smem>>
    %c0_3 = arith.constant 0 : index
    %c0_4 = arith.constant 0 : index
    %2 = vector.load %arg3[%c0_3, %c0_4] : memref<8x1024xf32, #tpu.memory_space<vmem>>, vector<8x1024xf32>
    %cst = arith.constant 0.000000e+00 : f32
    %3 = vector.broadcast %cst : f32 to vector<8x1024xf32>
    %4 = arith.maximumf %2, %3 : vector<8x1024xf32>
    %5 = arith.mulf %4, %4 : vector<8x1024xf32>
    %6 = vector.broadcast %0 : f32 to vector<8x1024xf32>
    %7 = arith.mulf %6, %5 : vector<8x1024xf32>
    %8 = vector.broadcast %1 : f32 to vector<8x1024xf32>
    %9 = arith.addf %7, %8 : vector<8x1024xf32>
    %c0_5 = arith.constant 0 : index
    %c0_6 = arith.constant 0 : index
    %10 = vector.load %arg4[%c0_5, %c0_6] : memref<8x1024xf32, #tpu.memory_space<vmem>>, vector<8x1024xf32>
    tpu.vector_store %arg4[%c0_5, %c0_6], %9 {strides = array<i32>} : memref<8x1024xf32, #tpu.memory_space<vmem>>, vector<8x1024xf32>,
    return
  }
  func.func @transform_0(%arg0: i32) -> (i32, i32) {
    %c0_i32 = arith.constant 0 : i32
    %c0_i32_0 = arith.constant 0 : i32
    %c0_i32_1 = arith.constant 0 : i32
    return %c0_i32, %c0_i32_0 : i32, i32
  }
  func.func @transform_1(%arg0: i32) -> (i32, i32) {
    %c0_i32 = arith.constant 0 : i32
    %c0_i32_0 = arith.constant 0 : i32
    %c0_i32_1 = arith.constant 0 : i32
    return %c0_i32, %c0_i32_0 : i32, i32
  }
  func.func @transform_2(%arg0: i32) -> (i32, i32) {
    %c0_i32 = arith.constant 0 : i32
    %c0_i32_0 = arith.constant 0 : i32
    return %arg0, %c0_i32 : i32, i32
  }
  func.func @transform_3(%arg0: i32) -> (i32, i32) {
    %c0_i32 = arith.constant 0 : i32
    %c0_i32_0 = arith.constant 0 : i32
    return %arg0, %c0_i32 : i32, i32
  }
}

</mosaic_0001>

<llo_original>
// kernel: tpu_custom_call.1
$region0: #{tpu_custom_call.1}
  #allocation0 [shape = 'u32[]', space=smem, size = 0x4, offset = 0x4, fixed_abs, tag = 'smem constant byte address 0x4 - core index']
  #allocation1 [shape = 'u32[72,128]{1,0:T(1,128)}', space=vmem, size = 0x9000, scoped, tag = 'internal scratch']
  #allocation2 [shape = 'f32[1,1]{1,0:T(1,128)S(6)}', space=smem, size = 0x200, scoped, tag = 'scoped memory for tpu_custom_call.1']
  #allocation3 [shape = 'f32[1,1]{1,0:T(1,128)S(6)}', space=smem, size = 0x200, scoped, tag = 'scoped memory for tpu_custom_call.1']
  %s0 = inlined_call_operand.<no memory space> [shape: f32[1,1], index: 0, kind: input, shape index: {}]
  %s1 = inlined_call_operand.<no memory space> [shape: f32[1,1], index: 1, kind: input, shape index: {}]
  %s2 = inlined_call_operand.hbm [shape: f32[8,1024], index: 2, kind: input, shape index: {}]
  %s3 = inlined_call_operand.hbm [shape: f32[8,1024], index: 3, kind: output, shape index: {}]
  %s4 = sld [smem:[#allocation0]]
  $region26: #{tpu_custom_call.1} parent=0
    _
  %s6 = ssub.s32 1, %s4
  %s7 = scalar_select 0, %s6, %s4
  %8 = sst [smem:[#allocation2]] %s0
  %9 = sst [smem:[#allocation3]] %s1
  $region1: #{tpu_custom_call.1} parent=0
    #allocation4 [shape = 'u8[32768]{0}', space=vmem, size = 0x8000, scoped, tag = 'input window, operand 2, single buffered']
    #allocation5 [shape = 's32[1]{0}', space=sflag, size = 0x4, scoped, tag = 'scoped memory for tpu_custom_call.1']
    #allocation6 [shape = 's32[1]{0}', space=sflag, size = 0x4, scoped, tag = 'scoped memory for tpu_custom_call.1']
    #allocation7 [shape = 'u8[32768]{0}', space=vmem, size = 0x8000, scoped, tag = 'output window, operand 0, single buffered']
    %10 = vsyncpa [#allocation5], 0
    %11 = vsyncpa [#allocation6], 0
    // Predicated region
    $region2: #{tpu_custom_call.1} parent=1 // pred_check
      _
    $region3: #{tpu_custom_call.1} parent=1 // pred_check_branch
      %13 = sbr.rel (0) target = $region5
    $region4: #{tpu_custom_call.1} parent=1 // pred_region
      _
    $region5: #{tpu_custom_call.1} parent=1 // pred_fallthru
      _
    // Predicated region
    $region6: #{tpu_custom_call.1} parent=1 // pred_check
      _
    $region7: #{tpu_custom_call.1} parent=1 // pred_check_branch
      %15 = sbr.rel (0) target = $region9
    $region8: #{tpu_custom_call.1} parent=1 // pred_region
      _
    $region9: #{tpu_custom_call.1} parent=1 // pred_fallthru
      _
    // Predicated region
    $region10: #{tpu_custom_call.1} parent=1 // pred_check
      _
    $region11: #{tpu_custom_call.1} parent=1 // pred_check_branch
      %17 = sbr.rel (0) target = $region13
    $region12: #{tpu_custom_call.1} parent=1 // pred_region
      %19 = vsyncadd [#allocation5], 0
      %s21 = sshll.u32 %s2, 4
      %s22 = int_to_ptr.hbm [resolvable:$true] %s21
      %s23 = sshll.u32 [#allocation4], 4
      %s24 = int_to_ptr.vmem [resolvable:$true] %s23
      %26 = dma.hbm_to_vmem [thread:$0]  %s22, 1024, %s24, [#allocation5]
    $region13: #{tpu_custom_call.1} parent=1 // pred_fallthru
      _
    // Predicated region
    $region14: #{tpu_custom_call.1} parent=1 // pred_check
      _
    $region15: #{tpu_custom_call.1} parent=1 // pred_check_branch
      %28 = sbr.rel (0) target = $region17
    $region16: #{tpu_custom_call.1} parent=1 // pred_region
      %30 = dma.done [#allocation5], 1024
    $region17: #{tpu_custom_call.1} parent=1 // pred_fallthru
      _
    %s31 = sld [smem:[#allocation2]]
    %s32 = sld [smem:[#allocation3]]
    %v33 = vld [vmem:[#allocation4] sm:$0xff]
    %v34 = vld [vmem:[#allocation4 + $0x8] sm:$0xff]
    %v35 = vld [vmem:[#allocation4 + $0x10] sm:$0xff]
    %v36 = vld [vmem:[#allocation4 + $0x18] sm:$0xff]
    %v37 = vld [vmem:[#allocation4 + $0x20] sm:$0xff]
    %v38 = vld [vmem:[#allocation4 + $0x28] sm:$0xff]
    %v39 = vld [vmem:[#allocation4 + $0x30] sm:$0xff]
    %v40 = vld [vmem:[#allocation4 + $0x38] sm:$0xff]
    %v41 = vmax.f32 %v33, 0.0
    %v42 = vmax.f32 %v34, 0.0
    %v43 = vmax.f32 %v35, 0.0
    %v44 = vmax.f32 %v36, 0.0
    %v45 = vmax.f32 %v37, 0.0
    %v46 = vmax.f32 %v38, 0.0
    %v47 = vmax.f32 %v39, 0.0
    %v48 = vmax.f32 %v40, 0.0
    %v49 = vmul.f32 %v41, %v41
    %v50 = vmul.f32 %v42, %v42
    %v51 = vmul.f32 %v43, %v43
    %v52 = vmul.f32 %v44, %v44
    %v53 = vmul.f32 %v45, %v45
    %v54 = vmul.f32 %v46, %v46
    %v55 = vmul.f32 %v47, %v47
    %v56 = vmul.f32 %v48, %v48
    %v57 = vstv %s31
    %v58 = vmul.f32 %v57, %v49
    %v59 = vmul.f32 %v57, %v50
    %v60 = vmul.f32 %v57, %v51
    %v61 = vmul.f32 %v57, %v52
    %v62 = vmul.f32 %v57, %v53
    %v63 = vmul.f32 %v57, %v54
    %v64 = vmul.f32 %v57, %v55
    %v65 = vmul.f32 %v57, %v56
    %v66 = vstv %s32
    %v67 = vadd.f32 %v58, %v66
    %v68 = vadd.f32 %v59, %v66
    %v69 = vadd.f32 %v60, %v66
    %v70 = vadd.f32 %v61, %v66
    %v71 = vadd.f32 %v62, %v66
    %v72 = vadd.f32 %v63, %v66
    %v73 = vadd.f32 %v64, %v66
    %v74 = vadd.f32 %v65, %v66
    %75 = vst [vmem:[#allocation7] sm:$0xff] %v67
    %76 = vst [vmem:[#allocation7 + $0x8] sm:$0xff] %v68
    %77 = vst [vmem:[#allocation7 + $0x10] sm:$0xff] %v69
    %78 = vst [vmem:[#allocation7 + $0x18] sm:$0xff] %v70
    %79 = vst [vmem:[#allocation7 + $0x20] sm:$0xff] %v71
    %80 = vst [vmem:[#allocation7 + $0x28] sm:$0xff] %v72
    %81 = vst [vmem:[#allocation7 + $0x30] sm:$0xff] %v73
    %82 = vst [vmem:[#allocation7 + $0x38] sm:$0xff] %v74
    // Predicated region
    $region18: #{tpu_custom_call.1} parent=1 // pred_check
      _
    $region19: #{tpu_custom_call.1} parent=1 // pred_check_branch
      %84 = sbr.rel (0) target = $region21
    $region20: #{tpu_custom_call.1} parent=1 // pred_region
      %86 = vsyncadd [#allocation6], 0
      %s88 = sshll.u32 [#allocation7], 4
      %s89 = int_to_ptr.vmem [resolvable:$true] %s88
      %s90 = sshll.u32 %s3, 4
      %s91 = int_to_ptr.hbm [resolvable:$true] %s90
      %93 = dma.vmem_to_hbm [thread:$0]  %s89, 1024, %s91, [#allocation6]
    $region21: #{tpu_custom_call.1} parent=1 // pred_fallthru
      _
    // Predicated region
    $region22: #{tpu_custom_call.1} parent=1 // pred_check
      _
    $region23: #{tpu_custom_call.1} parent=1 // pred_check_branch
      %95 = sbr.rel (0) target = $region25
    $region24: #{tpu_custom_call.1} parent=1 // pred_region
      %97 = dma.done [#allocation6], 1024
    $region25: #{tpu_custom_call.1} parent=1 // pred_fallthru
      _
    %98 = vsyncpa [#allocation5], 1
    %99 = vsyncpa [#allocation6], 1

</llo_original>
